<compile_context>
chip_gen: v6e
topology: v6e:2x2x1
jax: 0.10.0
libtpu: 0.0.40
codegen_flags: <defaults>
</compile_context>

<pallas_src>
import functools

import jax
import jax.numpy as jnp
from jax.experimental import pallas as pl
from jax.experimental.pallas import tpu as pltpu


def _round_up(x: int, m: int) -> int:
    return ((x + m - 1) // m) * m


def _cls_head_kernel(x_ref, w1_ref, b1_ref, w2_ref, b2_ref, o_ref):
    # x_ref:  (tm, input_dim)          compute dtype (bf16 by default)
    # w1_ref: (input_dim, inner_pad)   compute dtype
    # b1_ref: (1, inner_pad)           f32
    # w2_ref: (inner_pad, c_pad)       compute dtype
    # b2_ref: (1, c_pad)               f32
    # o_ref:  (tm, c_pad)              output dtype
    x = x_ref[...]
    # dense: x @ W1 + b1  (MXU matmul with f32 accumulation; bias add in f32 on VPU)
    h = jnp.dot(x, w1_ref[...], preferred_element_type=jnp.float32) + b1_ref[...]
    # tanh activation in f32 (EUP)
    h = jnp.tanh(h)
    # Downcast the activation to the matmul compute dtype before the second
    # GEMM; accumulation stays f32.
    h = h.astype(w2_ref.dtype)
    # out_proj: h @ W2 + b2
    o = jnp.dot(h, w2_ref[...], preferred_element_type=jnp.float32) + b2_ref[...]
    o_ref[...] = o.astype(o_ref.dtype)


@functools.partial(jax.jit, static_argnames=("tm", "compute_dtype"))
def mass_classification_head(hidden_states, w1, b1, w2, b2, *,
                             tm=512, compute_dtype=jnp.bfloat16):
    """[batch, seq, input_dim] -> [batch, seq, num_classes].

    w1: [input_dim, inner_dim], b1: [inner_dim]
    w2: [inner_dim, num_classes], b2: [num_classes]
    (weights pre-transposed vs. PyTorch nn.Linear's [out, in] storage)
    """
    batch, seq, input_dim = hidden_states.shape
    inner_dim = w1.shape[1]
    num_classes = w2.shape[1]
    out_dtype = hidden_states.dtype
    M = batch * seq

    # --- Row tile: big VMEM-friendly tile; pad M so divisibility never forces a
    # tiny tile. 512 default is a multiple of 256 (v6e/v7x MXU) and 128 (v5e).
    if M <= tm:
        tm_eff = _round_up(M, 16)      # single grid step; 16 = bf16 sublane pack
    else:
        tm_eff = _round_up(tm, 128)
    m_pad = _round_up(M, tm_eff)

    # --- Lane-pad the small feature dims (exact: pads are zeros, tanh(0)=0).
    inner_pad = _round_up(inner_dim, 128)
    c_pad = _round_up(num_classes, 128)

    x2d = hidden_states.reshape(M, input_dim)
    if m_pad != M:
        x2d = jnp.pad(x2d, ((0, m_pad - M), (0, 0)))
    x_c = x2d.astype(compute_dtype)

    w1_c = jnp.pad(w1, ((0, 0), (0, inner_pad - inner_dim))).astype(compute_dtype)
    b1_p = jnp.pad(b1, (0, inner_pad - inner_dim)).astype(jnp.float32).reshape(1, inner_pad)
    w2_c = jnp.pad(w2, ((0, inner_pad - inner_dim),
                        (0, c_pad - num_classes))).astype(compute_dtype)
    b2_p = jnp.pad(b2, (0, c_pad - num_classes)).astype(jnp.float32).reshape(1, c_pad)

    grid = (m_pad // tm_eff,)

    # --- VMEM budget: x/out tiles double-buffered by the pipeline; constant-
    # index weight blocks stay resident (counted with 2 buffers). Cap at 64 MiB
    # so the same tiling also fits v7x's smaller physical VMEM.
    isz_c = jnp.dtype(compute_dtype).itemsize
    isz_o = jnp.dtype(out_dtype).itemsize
    vmem_est = (
        2 * tm_eff * input_dim * isz_c                              # x tile (dbl buf)
        + 2 * tm_eff * c_pad * isz_o                                # out tile (dbl buf)
        + 2 * (input_dim * inner_pad + inner_pad * c_pad) * isz_c   # resident weights
        + 2 * (inner_pad + c_pad) * 4                               # biases
        + tm_eff * (inner_pad + c_pad) * 4                          # f32 intermediates
    )
    vmem_limit = int(min(max(2 * vmem_est, 32 * 1024 * 1024), 64 * 1024 * 1024))

    cost = pl.CostEstimate(
        flops=2 * m_pad * (input_dim * inner_pad + inner_pad * c_pad),
        transcendentals=m_pad * inner_pad,
        bytes_accessed=(m_pad * input_dim * isz_c
                        + (input_dim * inner_pad + inner_pad * c_pad) * isz_c
                        + (inner_pad + c_pad) * 4
                        + m_pad * c_pad * isz_o),
    )

    out2d = pl.pallas_call(
        _cls_head_kernel,
        out_shape=jax.ShapeDtypeStruct((m_pad, c_pad), out_dtype),
        grid_spec=pltpu.PrefetchScalarGridSpec(
            num_scalar_prefetch=0,
            grid=grid,
            in_specs=[
                pl.BlockSpec((tm_eff, input_dim), lambda i: (i, 0)),     # x row tile
                pl.BlockSpec((input_dim, inner_pad), lambda i: (0, 0)),  # W1 (resident)
                pl.BlockSpec((1, inner_pad), lambda i: (0, 0)),          # b1
                pl.BlockSpec((inner_pad, c_pad), lambda i: (0, 0)),      # W2 (resident)
                pl.BlockSpec((1, c_pad), lambda i: (0, 0)),              # b2
            ],
            out_specs=pl.BlockSpec((tm_eff, c_pad), lambda i: (i, 0)),
        ),
        compiler_params=pltpu.CompilerParams(
            dimension_semantics=("parallel",),
            vmem_limit_bytes=vmem_limit,
        ),
        cost_estimate=cost,
    )(x_c, w1_c, b1_p, w2_c, b2_p)

    out = out2d[:M, :num_classes]
    return out.reshape(batch, seq, num_classes)


if __name__ == "__main__":
    # Small, module-consistent shapes.
    batch, seq = 2, 8
    input_dim, inner_dim, num_classes = 32, 32, 8
    # pooler_dropout is irrelevant in eval mode (identity).

    key = jax.random.PRNGKey(0)
    kx, kw1, kb1, kw2, kb2, kx2, kx3 = jax.random.split(key, 7)

    x = jax.random.normal(kx, (batch, seq, input_dim), dtype=jnp.float32)
    # Deterministic "Linear" params, stored as [in, out] (transposed vs PyTorch).
    w1 = jax.random.normal(kw1, (input_dim, inner_dim), dtype=jnp.float32) * 0.02
    b1 = jax.random.normal(kb1, (inner_dim,), dtype=jnp.float32) * 0.02
    w2 = jax.random.normal(kw2, (inner_dim, num_classes), dtype=jnp.float32) * 0.02
    b2 = jax.random.normal(kb2, (num_classes,), dtype=jnp.float32) * 0.02

    def ref_head(xx):
        return jnp.tanh(xx @ w1 + b1) @ w2 + b2

    # (a) f32 compute path -- matches the PyTorch f32 head semantics tightly.
    out_f32 = mass_classification_head(x, w1, b1, w2, b2, compute_dtype=jnp.float32)
    out_f32 = jax.block_until_ready(out_f32)
    assert out_f32.shape == (batch, seq, num_classes)
    assert jnp.allclose(out_f32, ref_head(x), atol=1e-5, rtol=1e-5)

    # (b) default bf16-matmul path on a ragged M (exercises row/lane padding).
    x_odd = jax.random.normal(kx2, (3, 5, input_dim), dtype=jnp.float32)
    out_bf16 = mass_classification_head(x_odd, w1, b1, w2, b2)
    out_bf16 = jax.block_until_ready(out_bf16)
    assert out_bf16.shape == (3, 5, num_classes)
    assert jnp.allclose(out_bf16, ref_head(x_odd), atol=2e-2, rtol=2e-2)

    # (c) multi-tile grid path (M=256, tm=128 -> 2 parallel row tiles).
    x_big = jax.random.normal(kx3, (4, 64, input_dim), dtype=jnp.float32)
    out_big = mass_classification_head(x_big, w1, b1, w2, b2, tm=128,
                                       compute_dtype=jnp.float32)
    out_big = jax.block_until_ready(out_big)
    assert out_big.shape == (4, 64, num_classes)
    assert jnp.allclose(out_big, ref_head(x_big), atol=1e-5, rtol=1e-5)

    print("KERNEL_OK")
</pallas_src>

<mosaic_0001>
module attributes {stable_mosaic.version = 11 : i64} {
  func.func @_cls_head_kernel(%arg0: i32, %arg1: memref<16x32xf32, #tpu.memory_space<vmem>>, %arg2: memref<32x128xf32, #tpu.memory_space<vmem>>, %arg3: memref<1x128xf32, #tpu.memory_space<vmem>>, %arg4: memref<128x128xf32, #tpu.memory_space<vmem>>, %arg5: memref<1x128xf32, #tpu.memory_space<vmem>>, %arg6: memref<16x128xf32, #tpu.memory_space<vmem>>) attributes {dimension_semantics = [#tpu.dimension_semantics<parallel>], iteration_bounds = array<i64: 1>, scalar_prefetch = 0 : i64, scratch_operands = 0 : i64, tpu.core_type = #tpu.core_type<tc>, window_params = [{transform_indices = @transform_0, window_bounds = array<i64: 16, 32>}, {pipeline_mode = #tpu.pipeline_mode<synchronous>, transform_indices = @transform_1, window_bounds = array<i64: 32, 128>}, {pipeline_mode = #tpu.pipeline_mode<synchronous>, transform_indices = @transform_2, window_bounds = array<i64: 1, 128>}, {pipeline_mode = #tpu.pipeline_mode<synchronous>, transform_indices = @transform_3, window_bounds = array<i64: 128, 128>}, {pipeline_mode = #tpu.pipeline_mode<synchronous>, transform_indices = @transform_4, window_bounds = array<i64: 1, 128>}, {transform_indices = @transform_5, window_bounds = array<i64: 16, 128>}]} {
    %c0 = arith.constant 0 : index
    %c0_0 = arith.constant 0 : index
    %0 = vector.load %arg1[%c0, %c0_0] : memref<16x32xf32, #tpu.memory_space<vmem>>, vector<16x32xf32>
    %c0_1 = arith.constant 0 : index
    %c0_2 = arith.constant 0 : index
    %1 = vector.load %arg2[%c0_1, %c0_2] : memref<32x128xf32, #tpu.memory_space<vmem>>, vector<32x128xf32>
    %cst = arith.constant dense<0.000000e+00> : vector<16x128xf32>
    %2 = tpu.matmul %0, %1, %cst {dimension_numbers = #tpu.dot_dimension_numbers<[1], [0], [0], [1], [0, 0, 1, 1], [], []>} : vector<16x32xf32>, vector<32x128xf32>, vector<16x128xf32> -> vector<16x128xf32>
    %c0_3 = arith.constant 0 : index
    %c0_4 = arith.constant 0 : index
    %3 = vector.load %arg3[%c0_3, %c0_4] : memref<1x128xf32, #tpu.memory_space<vmem>>, vector<1x128xf32>
    %4 = vector.broadcast %3 : vector<1x128xf32> to vector<16x128xf32>
    %5 = arith.addf %2, %4 : vector<16x128xf32>
    %6 = math.tanh %5 : vector<16x128xf32>
    %c0_5 = arith.constant 0 : index
    %c0_6 = arith.constant 0 : index
    %7 = vector.load %arg4[%c0_5, %c0_6] : memref<128x128xf32, #tpu.memory_space<vmem>>, vector<128x128xf32>
    %cst_7 = arith.constant dense<0.000000e+00> : vector<16x128xf32>
    %8 = tpu.matmul %6, %7, %cst_7 {dimension_numbers = #tpu.dot_dimension_numbers<[1], [0], [0], [1], [0, 0, 1, 1], [], []>} : vector<16x128xf32>, vector<128x128xf32>, vector<16x128xf32> -> vector<16x128xf32>
    %c0_8 = arith.constant 0 : index
    %c0_9 = arith.constant 0 : index
    %9 = vector.load %arg5[%c0_8, %c0_9] : memref<1x128xf32, #tpu.memory_space<vmem>>, vector<1x128xf32>
    %10 = vector.broadcast %9 : vector<1x128xf32> to vector<16x128xf32>
    %11 = arith.addf %8, %10 : vector<16x128xf32>
    %c0_10 = arith.constant 0 : index
    %c0_11 = arith.constant 0 : index
    %12 = vector.load %arg6[%c0_10, %c0_11] : memref<16x128xf32, #tpu.memory_space<vmem>>, vector<16x128xf32>
    tpu.vector_store %arg6[%c0_10, %c0_11], %11 {strides = array<i32>} : memref<16x128xf32, #tpu.memory_space<vmem>>, vector<16x128xf32>,
    return
  }
  func.func @transform_0(%arg0: i32) -> (i32, i32) {
    %c0_i32 = arith.constant 0 : i32
    %c0_i32_0 = arith.constant 0 : i32
    return %arg0, %c0_i32 : i32, i32
  }
  func.func @transform_1(%arg0: i32) -> (i32, i32) {
    %c0_i32 = arith.constant 0 : i32
    %c0_i32_0 = arith.constant 0 : i32
    %c0_i32_1 = arith.constant 0 : i32
    return %c0_i32, %c0_i32_0 : i32, i32
  }
  func.func @transform_2(%arg0: i32) -> (i32, i32) {
    %c0_i32 = arith.constant 0 : i32
    %c0_i32_0 = arith.constant 0 : i32
    %c0_i32_1 = arith.constant 0 : i32
    return %c0_i32, %c0_i32_0 : i32, i32
  }
  func.func @transform_3(%arg0: i32) -> (i32, i32) {
    %c0_i32 = arith.constant 0 : i32
    %c0_i32_0 = arith.constant 0 : i32
    %c0_i32_1 = arith.constant 0 : i32
    return %c0_i32, %c0_i32_0 : i32, i32
  }
  func.func @transform_4(%arg0: i32) -> (i32, i32) {
    %c0_i32 = arith.constant 0 : i32
    %c0_i32_0 = arith.constant 0 : i32
    %c0_i32_1 = arith.constant 0 : i32
    return %c0_i32, %c0_i32_0 : i32, i32
  }
  func.func @transform_5(%arg0: i32) -> (i32, i32) {
    %c0_i32 = arith.constant 0 : i32
    %c0_i32_0 = arith.constant 0 : i32
    return %arg0, %c0_i32 : i32, i32
  }
}

</mosaic_0001>

<llo_original>
// kernel: mass_classification_head.1
$region0: #{mass_classification_head.1}
  #allocation0 [shape = 'u32[]', space=smem, size = 0x4, offset = 0x4, fixed_abs, tag = 'smem constant byte address 0x4 - core index']
  #allocation1 [shape = 'u32[144,128]{1,0:T(1,128)}', space=vmem, size = 0x12000, scoped, tag = 'internal scratch']
  %s0 = inlined_call_operand.vmem [shape: f32[16,32], index: 0, kind: input, shape index: {}]
  %s1 = inlined_call_operand.vmem [shape: f32[32,128], index: 1, kind: input, shape index: {}]
  %s2 = inlined_call_operand.vmem [shape: f32[1,128], index: 2, kind: input, shape index: {}]
  %s3 = inlined_call_operand.vmem [shape: f32[128,128], index: 3, kind: input, shape index: {}]
  %s4 = inlined_call_operand.vmem [shape: f32[1,128], index: 4, kind: input, shape index: {}]
  %s5 = inlined_call_operand.vmem [shape: f32[16,128], index: 5, kind: output, shape index: {}]
  %s6 = sld [smem:[#allocation0]]
  $region30: #{mass_classification_head.1} parent=0
    _
  %s8 = ssub.s32 1, %s6
  %s9 = scalar_select 0, %s8, %s6
  // Predicated region
  $region2: #{mass_classification_head.1} parent=0 // pred_check
    _
  $region3: #{mass_classification_head.1} parent=0 // pred_check_branch
    %11 = sbr.rel (0) target = $region5
  $region4: #{mass_classification_head.1} parent=0 // pred_region
    _
  $region5: #{mass_classification_head.1} parent=0 // pred_fallthru
    _
  // Predicated region
  $region6: #{mass_classification_head.1} parent=0 // pred_check
    _
  $region7: #{mass_classification_head.1} parent=0 // pred_check_branch
    %13 = sbr.rel (0) target = $region9
  $region8: #{mass_classification_head.1} parent=0 // pred_region
    _
  $region9: #{mass_classification_head.1} parent=0 // pred_fallthru
    _
  // Predicated region
  $region10: #{mass_classification_head.1} parent=0 // pred_check
    _
  $region11: #{mass_classification_head.1} parent=0 // pred_check_branch
    %15 = sbr.rel (0) target = $region13
  $region12: #{mass_classification_head.1} parent=0 // pred_region
    _
  $region13: #{mass_classification_head.1} parent=0 // pred_fallthru
    _
  // Predicated region
  $region14: #{mass_classification_head.1} parent=0 // pred_check
    _
  $region15: #{mass_classification_head.1} parent=0 // pred_check_branch
    %17 = sbr.rel (0) target = $region17
  $region16: #{mass_classification_head.1} parent=0 // pred_region
    _
  $region17: #{mass_classification_head.1} parent=0 // pred_fallthru
    _
  // Predicated region
  $region18: #{mass_classification_head.1} parent=0 // pred_check
    _
  $region19: #{mass_classification_head.1} parent=0 // pred_check_branch
    %19 = sbr.rel (0) target = $region21
  $region20: #{mass_classification_head.1} parent=0 // pred_region
    _
  $region21: #{mass_classification_head.1} parent=0 // pred_fallthru
    _
  %v20 = vld [vmem:[%s0] sm:$0xff]
  %v21 = vld [vmem:[%s0 + $0x8] sm:$0xff]
  %v22 = vld [vmem:[%s1] sm:$0xff]
  %v23 = vld [vmem:[%s1 + $0x8] sm:$0xff]
  %v24 = vld [vmem:[%s1 + $0x10] sm:$0xff]
  %v25 = vld [vmem:[%s1 + $0x18] sm:$0xff]
  %v26 = vld [vmem:[%s2] sm:$0x1]
  %v28 = vlaneseq
  %v29 = vshrl.u32 %v28, 7
  %v30 = vsub.s32 0, %v29
  %v31 = vrot.slane %v26, %v30
  %vm33 = vcmask 261120
  %v35 = vsel %vm33, %v20, 0
  %v38 = vsel %vm33, %v21, 0
  %40 = vmatprep.subr.mxu0 0.0
  %41 = vmatpush1.msra.mxu0 0.0
  %42 = vmatprep.subr.mxu0 0.0
  %43 = vmatpush1.msra.mxu0 0.0
  %44 = vmatprep.subr.mxu0 0.0
  %45 = vmatpush1.msra.mxu0 0.0
  %46 = vmatprep.subr.mxu0 0.0
  %47 = vmatpush1.msra.mxu0 0.0
  %48 = vmatprep.subr.mxu0 0.0
  %49 = vmatpush1.msra.mxu0 0.0
  %50 = vmatprep.subr.mxu0 0.0
  %51 = vmatpush1.msra.mxu0 0.0
  %52 = vmatprep.subr.mxu0 0.0
  %53 = vmatpush1.msra.mxu0 0.0
  %54 = vmatprep.subr.mxu0 0.0
  %55 = vmatpush1.msra.mxu0 0.0
  %56 = vmatprep.subr.mxu0 0.0
  %57 = vmatpush1.msra.mxu0 0.0
  %58 = vmatprep.subr.mxu0 0.0
  %59 = vmatpush1.msra.mxu0 0.0
  %60 = vmatprep.subr.mxu0 0.0
  %61 = vmatpush1.msra.mxu0 0.0
  %62 = vmatprep.subr.mxu0 0.0
  %63 = vmatpush1.msra.mxu0 0.0
  %64 = vmatprep.subr.mxu0 0.0
  %65 = vmatpush1.msra.mxu0 %v25
  %66 = vmatprep.subr.mxu0 0.0
  %67 = vmatpush1.msra.mxu0 %v24
  %68 = vmatprep.subr.mxu0 0.0
  %69 = vmatpush1.msra.mxu0 %v23
  %70 = vmatprep.subr.mxu0 0.0
  %71 = vmatpush1.msra.mxu0 %v22
  %72 = vmatprep.subr.mxu0 0.0
  %73 = vmatpush2.msra.mxu0 0.0
  %74 = vmatprep.subr.mxu0 0.0
  %75 = vmatpush2.msra.mxu0 0.0
  %76 = vmatprep.subr.mxu0 0.0
  %77 = vmatpush2.msra.mxu0 0.0
  %78 = vmatprep.subr.mxu0 0.0
  %79 = vmatpush2.msra.mxu0 0.0
  %80 = vmatprep.subr.mxu0 0.0
  %81 = vmatpush2.msra.mxu0 0.0
  %82 = vmatprep.subr.mxu0 0.0
  %83 = vmatpush2.msra.mxu0 0.0
  %84 = vmatprep.subr.mxu0 0.0
  %85 = vmatpush2.msra.mxu0 0.0
  %86 = vmatprep.subr.mxu0 0.0
  %87 = vmatpush2.msra.mxu0 0.0
  %88 = vmatprep.subr.mxu0 0.0
  %89 = vmatpush2.msra.mxu0 0.0
  %90 = vmatprep.subr.mxu0 0.0
  %91 = vmatpush2.msra.mxu0 0.0
  %92 = vmatprep.subr.mxu0 0.0
  %93 = vmatpush2.msra.mxu0 0.0
  %94 = vmatprep.subr.mxu0 0.0
  %95 = vmatpush2.msra.mxu0 0.0
  %96 = vmatprep.subr.mxu0 0.0
  %97 = vmatpush2.msra.mxu0 0.0
  %98 = vmatprep.subr.mxu0 0.0
  %99 = vmatpush2.msra.mxu0 0.0
  %100 = vmatprep.subr.mxu0 0.0
  %101 = vmatpush2.msra.mxu0 0.0
  %102 = vmatprep.subr.mxu0 0.0
  %103 = vmatpush2.msra.mxu0 0.0
  %104 = vmatprep.mubr.f32.mxu0 0.0
  %105 = vmatmul.mubr.f32.gmra.mxu0 %v35
  %v106 = vpop.f32.mrf.mxu0
  %v107 = vadd.f32 %v31, %v106
  %v108 = vpop.f32.mrf.mxu0
  %109 = vmatprep.mubr.f32.mxu0 0.0
  %110 = vmatmul.mubr.f32.gmra.mxu0 %v38
  %v111 = vpop.f32.mrf.mxu0
  %v112 = vadd.f32 %v31, %v111
  %v113 = vpop.f32.mrf.mxu0
  %114 = vdwg.mxu0
  %v115 = vtanh.pop %v107
  %v116 = vtanh.pop %v112
  %v117 = vld [vmem:[%s3] sm:$0xff]
  %v118 = vld [vmem:[%s3 + $0x8] sm:$0xff]
  %v119 = vld [vmem:[%s3 + $0x10] sm:$0xff]
  %v120 = vld [vmem:[%s3 + $0x18] sm:$0xff]
  %v121 = vld [vmem:[%s3 + $0x20] sm:$0xff]
  %v122 = vld [vmem:[%s3 + $0x28] sm:$0xff]
  %v123 = vld [vmem:[%s3 + $0x30] sm:$0xff]
  %v124 = vld [vmem:[%s3 + $0x38] sm:$0xff]
  %v125 = vld [vmem:[%s3 + $0x40] sm:$0xff]
  %v126 = vld [vmem:[%s3 + $0x48] sm:$0xff]
  %v127 = vld [vmem:[%s3 + $0x50] sm:$0xff]
  %v128 = vld [vmem:[%s3 + $0x58] sm:$0xff]
  %v129 = vld [vmem:[%s3 + $0x60] sm:$0xff]
  %v130 = vld [vmem:[%s3 + $0x68] sm:$0xff]
  %v131 = vld [vmem:[%s3 + $0x70] sm:$0xff]
  %v132 = vld [vmem:[%s3 + $0x78] sm:$0xff]
  %v133 = vld [vmem:[%s4] sm:$0x1]
  %v135 = vlaneseq
  %v136 = vshrl.u32 %v135, 7
  %v137 = vsub.s32 0, %v136
  %v138 = vrot.slane %v133, %v137
  %140 = vmatprep.subr.mxu0 0.0
  %141 = vmatpush1.msra.mxu0 %v132
  %142 = vmatprep.subr.mxu0 0.0
  %143 = vmatpush1.msra.mxu0 %v131
  %144 = vmatprep.subr.mxu0 0.0
  %145 = vmatpush1.msra.mxu0 %v130
  %146 = vmatprep.subr.mxu0 0.0
  %147 = vmatpush1.msra.mxu0 %v129
  %148 = vmatprep.subr.mxu0 0.0
  %149 = vmatpush1.msra.mxu0 %v128
  %150 = vmatprep.subr.mxu0 0.0
  %151 = vmatpush1.msra.mxu0 %v127
  %152 = vmatprep.subr.mxu0 0.0
  %153 = vmatpush1.msra.mxu0 %v126
  %154 = vmatprep.subr.mxu0 0.0
  %155 = vmatpush1.msra.mxu0 %v125
  %156 = vmatprep.subr.mxu0 0.0
  %157 = vmatpush1.msra.mxu0 %v124
  %158 = vmatprep.subr.mxu0 0.0
  %159 = vmatpush1.msra.mxu0 %v123
  %160 = vmatprep.subr.mxu0 0.0
  %161 = vmatpush1.msra.mxu0 %v122
  %162 = vmatprep.subr.mxu0 0.0
  %163 = vmatpush1.msra.mxu0 %v121
  %164 = vmatprep.subr.mxu0 0.0
  %165 = vmatpush1.msra.mxu0 %v120
  %166 = vmatprep.subr.mxu0 0.0
  %167 = vmatpush1.msra.mxu0 %v119
  %168 = vmatprep.subr.mxu0 0.0
  %169 = vmatpush1.msra.mxu0 %v118
  %170 = vmatprep.subr.mxu0 0.0
  %171 = vmatpush1.msra.mxu0 %v117
  %172 = vmatprep.subr.mxu0 0.0
  %173 = vmatpush2.msra.mxu0 0.0
  %174 = vmatprep.subr.mxu0 0.0
  %175 = vmatpush2.msra.mxu0 0.0
  %176 = vmatprep.subr.mxu0 0.0
  %177 = vmatpush2.msra.mxu0 0.0
  %178 = vmatprep.subr.mxu0 0.0
  %179 = vmatpush2.msra.mxu0 0.0
  %180 = vmatprep.subr.mxu0 0.0
  %181 = vmatpush2.msra.mxu0 0.0
  %182 = vmatprep.subr.mxu0 0.0
  %183 = vmatpush2.msra.mxu0 0.0
  %184 = vmatprep.subr.mxu0 0.0
  %185 = vmatpush2.msra.mxu0 0.0
  %186 = vmatprep.subr.mxu0 0.0
  %187 = vmatpush2.msra.mxu0 0.0
  %188 = vmatprep.subr.mxu0 0.0
  %189 = vmatpush2.msra.mxu0 0.0
  %190 = vmatprep.subr.mxu0 0.0
  %191 = vmatpush2.msra.mxu0 0.0
  %192 = vmatprep.subr.mxu0 0.0
  %193 = vmatpush2.msra.mxu0 0.0
  %194 = vmatprep.subr.mxu0 0.0
  %195 = vmatpush2.msra.mxu0 0.0
  %196 = vmatprep.subr.mxu0 0.0
  %197 = vmatpush2.msra.mxu0 0.0
  %198 = vmatprep.subr.mxu0 0.0
  %199 = vmatpush2.msra.mxu0 0.0
  %200 = vmatprep.subr.mxu0 0.0
  %201 = vmatpush2.msra.mxu0 0.0
  %202 = vmatprep.subr.mxu0 0.0
  %203 = vmatpush2.msra.mxu0 0.0
  %204 = vmatprep.mubr.f32.mxu0 0.0
  %205 = vmatmul.mubr.f32.gmra.mxu0 %v115
  %v206 = vpop.f32.mrf.mxu0
  %v207 = vadd.f32 %v138, %v206
  %v208 = vpop.f32.mrf.mxu0
  %209 = vmatprep.mubr.f32.mxu0 0.0
  %210 = vmatmul.mubr.f32.gmra.mxu0 %v116
  %v211 = vpop.f32.mrf.mxu0
  %v212 = vadd.f32 %v138, %v211
  %v213 = vpop.f32.mrf.mxu0
  %214 = vdwg.mxu0
  %215 = vst [vmem:[%s5] sm:$0xff] %v207
  %216 = vst [vmem:[%s5 + $0x8] sm:$0xff] %v212
  // Predicated region
  $region22: #{mass_classification_head.1} parent=0 // pred_check
    _
  $region23: #{mass_classification_head.1} parent=0 // pred_check_branch
    %218 = sbr.rel (0) target = $region25
  $region24: #{mass_classification_head.1} parent=0 // pred_region
    _
  $region25: #{mass_classification_head.1} parent=0 // pred_fallthru
    _
  // Predicated region
  $region26: #{mass_classification_head.1} parent=0 // pred_check
    _
  $region27: #{mass_classification_head.1} parent=0 // pred_check_branch
    %220 = sbr.rel (0) target = $region29
  $region28: #{mass_classification_head.1} parent=0 // pred_region
    _
  $region29: #{mass_classification_head.1} parent=0 // pred_fallthru
    _

</llo_original>
